<compile_context>
chip_gen: v7x
topology: tpu7x:2x2x1
jax: 0.10.0
libtpu: 0.0.40
codegen_flags: <defaults>
</compile_context>

<pallas_src>
import functools

import jax
import jax.numpy as jnp
from jax.experimental import pallas as pl
from jax.experimental.pallas import tpu as pltpu


def _round_up(x, m):
    return ((x + m - 1) // m) * m


def _patch_embed_kernel(x_ref, w_ref, b_ref, o_ref):
    # x_ref: [TM, Kp] bf16 patch rows (streamed),
    # w_ref: [Kp, TN] bf16 projection tile (resident along inner M sweep),
    # b_ref: [1, TN]  f32 bias tile (resident),
    # o_ref: [TM, TN] output tile.
    acc = jnp.dot(x_ref[...], w_ref[...], preferred_element_type=jnp.float32)
    o_ref[...] = (acc + b_ref[...]).astype(o_ref.dtype)


def patch_embedding_forward(x_nchw, conv_weight, conv_bias, patch_size,
                            tile_m=512, tile_n=1024):
    """x_nchw: (B, C, H, W); conv_weight: (D, C, ps, ps); conv_bias: (D,)."""
    B, C, H, W = x_nchw.shape
    D = conv_weight.shape[0]
    ps = patch_size
    Hp, Wp = H // ps, W // ps
    num_patches = Hp * Wp
    M = B * num_patches
    K = C * ps * ps
    out_dtype = x_nchw.dtype

    # --- patch extraction (layout glue; lives in the same jit as the kernel) ---
    # Crop any remainder exactly like a stride=ps, kernel=ps conv, then
    # (B, C, Hp, ps, Wp, ps) -> (B, Hp, Wp, C, ps, ps) -> (M, K).
    # TODO(synk): move patch extraction in-kernel (grid over (B, Hp), reorder each
    # (C, ps, W) strip in VMEM before the dot) to cut HBM traffic for very large
    # inputs; kept as a single fused XLA transpose here for lowering robustness.
    x_crop = x_nchw[:, :, :Hp * ps, :Wp * ps]
    patches = x_crop.reshape(B, C, Hp, ps, Wp, ps)
    patches = patches.transpose(0, 2, 4, 1, 3, 5).reshape(M, K)

    # conv weight (D, C, ps, ps) -> (K, D); bias -> (1, D) in f32.
    w_mat = conv_weight.reshape(D, K).T
    b_mat = conv_bias.astype(jnp.float32).reshape(1, D)

    # Feed the MXU in bf16; accumulate in f32 inside the kernel.
    patches = patches.astype(jnp.bfloat16)
    w_mat = w_mat.astype(jnp.bfloat16)

    # Lane-dense layout: pad K and D to multiples of 128 (zero padding is exact).
    K_pad = _round_up(K, 128)
    D_pad = _round_up(D, 128)

    # Output-column tiling: single block for typical d_model, tiled for huge ones.
    if D_pad <= tile_n:
        TN = D_pad
    else:
        TN = 512
        D_pad = _round_up(D_pad, TN)
    grid_n = D_pad // TN

    if (K_pad != K) or (D_pad != D):
        w_mat = jnp.pad(w_mat, ((0, K_pad - K), (0, D_pad - D)))
        b_mat = jnp.pad(b_mat, ((0, 0), (0, D_pad - D)))

    # Row tile: multiple of 128 (MXU-friendly), capped at tile_m so double-buffered
    # tiles stay far below the scoped-VMEM default on every generation.
    TM = min(tile_m, _round_up(M, 128))
    M_pad = _round_up(M, TM)
    if (M_pad != M) or (K_pad != K):
        patches = jnp.pad(patches, ((0, M_pad - M), (0, K_pad - K)))
    grid_m = M_pad // TM

    cost = pl.CostEstimate(
        flops=2 * M_pad * K_pad * D_pad,
        transcendentals=0,
        bytes_accessed=(patches.size * patches.dtype.itemsize
                        + w_mat.size * w_mat.dtype.itemsize
                        + b_mat.size * b_mat.dtype.itemsize
                        + M_pad * D_pad * jnp.dtype(out_dtype).itemsize),
    )

    # Grid order (j, i): along the inner i sweep the weight/bias tiles keep the same
    # block index (no re-fetch) while patch row tiles and output tiles stream.
    out = pl.pallas_call(
        _patch_embed_kernel,
        out_shape=jax.ShapeDtypeStruct((M_pad, D_pad), out_dtype),
        grid=(grid_n, grid_m),
        in_specs=[
            pl.BlockSpec((TM, K_pad), lambda j, i: (i, 0)),   # streamed row tiles
            pl.BlockSpec((K_pad, TN), lambda j, i: (0, j)),   # resident weight tile
            pl.BlockSpec((1, TN), lambda j, i: (0, j)),       # resident bias tile
        ],
        out_specs=pl.BlockSpec((TM, TN), lambda j, i: (i, j)),
        compiler_params=pltpu.CompilerParams(
            dimension_semantics=("parallel", "parallel")),
        cost_estimate=cost,
    )(patches, w_mat, b_mat)

    # Drop padding, then (M, D) -> (B, num_patches, D) == conv -> flatten(2) -> transpose(1,2).
    out = out[:M, :D]
    return out.reshape(B, num_patches, D)


patch_embedding_forward_jit = jax.jit(
    patch_embedding_forward, static_argnames=("patch_size", "tile_m", "tile_n"))


if __name__ == "__main__":
    # Small, forward-consistent shapes.
    B, C, H, W = 2, 4, 16, 16
    patch_size = 8
    d_model = 32

    key = jax.random.PRNGKey(0)
    kx, kw, kb = jax.random.split(key, 3)

    x = jax.random.normal(kx, (B, C, H, W), dtype=jnp.float32)
    # Deterministic synthetic Conv2d params (same shapes as nn.Conv2d(C, d_model, ps, ps)).
    conv_w = jax.random.normal(kw, (d_model, C, patch_size, patch_size), dtype=jnp.float32) * 0.02
    conv_b = jax.random.normal(kb, (d_model,), dtype=jnp.float32) * 0.02

    y = patch_embedding_forward_jit(x, conv_w, conv_b, patch_size)
    y = jax.block_until_ready(y)

    # Reference check via lax.conv_general_dilated (NCHW, stride=ps), f32.
    ref = jax.lax.conv_general_dilated(
        x, conv_w, window_strides=(patch_size, patch_size), padding="VALID",
        dimension_numbers=("NCHW", "OIHW", "NCHW"))
    ref = ref + conv_b[None, :, None, None]
    Hp, Wp = H // patch_size, W // patch_size
    ref = ref.reshape(B, d_model, Hp * Wp).transpose(0, 2, 1)

    assert y.shape == (B, (H // patch_size) * (W // patch_size), d_model)
    # bf16 MXU operands vs. f32 reference -> relaxed tolerance.
    assert jnp.allclose(y, ref, atol=2e-2, rtol=2e-2), float(jnp.max(jnp.abs(y - ref)))

    print("KERNEL_OK")
</pallas_src>

<mosaic_0001>
module attributes {stable_mosaic.version = 11 : i64} {
  func.func @_patch_embed_kernel(%arg0: i32, %arg1: i32, %arg2: memref<128x256xbf16, #tpu.memory_space<vmem>>, %arg3: memref<256x128xbf16, #tpu.memory_space<vmem>>, %arg4: memref<1x128xf32, #tpu.memory_space<vmem>>, %arg5: memref<128x128xf32, #tpu.memory_space<vmem>>) attributes {dimension_semantics = [#tpu.dimension_semantics<parallel>, #tpu.dimension_semantics<parallel>], iteration_bounds = array<i64: 1, 1>, scalar_prefetch = 0 : i64, scratch_operands = 0 : i64, tpu.core_type = #tpu.core_type<tc>, window_params = [{transform_indices = @transform_0, window_bounds = array<i64: 128, 256>}, {transform_indices = @transform_1, window_bounds = array<i64: 256, 128>}, {transform_indices = @transform_2, window_bounds = array<i64: 1, 128>}, {transform_indices = @transform_3, window_bounds = array<i64: 128, 128>}]} {
    %c0 = arith.constant 0 : index
    %c0_0 = arith.constant 0 : index
    %0 = vector.load %arg2[%c0, %c0_0] : memref<128x256xbf16, #tpu.memory_space<vmem>>, vector<128x256xbf16>
    %c0_1 = arith.constant 0 : index
    %c0_2 = arith.constant 0 : index
    %1 = vector.load %arg3[%c0_1, %c0_2] : memref<256x128xbf16, #tpu.memory_space<vmem>>, vector<256x128xbf16>
    %cst = arith.constant dense<0.000000e+00> : vector<128x128xf32>
    %2 = tpu.matmul %0, %1, %cst {dimension_numbers = #tpu.dot_dimension_numbers<[1], [0], [0], [1], [0, 0, 1, 1], [], []>} : vector<128x256xbf16>, vector<256x128xbf16>, vector<128x128xf32> -> vector<128x128xf32>
    %c0_3 = arith.constant 0 : index
    %c0_4 = arith.constant 0 : index
    %3 = vector.load %arg4[%c0_3, %c0_4] : memref<1x128xf32, #tpu.memory_space<vmem>>, vector<1x128xf32>
    %4 = vector.broadcast %3 : vector<1x128xf32> to vector<128x128xf32>
    %5 = arith.addf %2, %4 : vector<128x128xf32>
    %c0_5 = arith.constant 0 : index
    %c0_6 = arith.constant 0 : index
    %6 = vector.load %arg5[%c0_5, %c0_6] : memref<128x128xf32, #tpu.memory_space<vmem>>, vector<128x128xf32>
    tpu.vector_store %arg5[%c0_5, %c0_6], %5 {strides = array<i32>} : memref<128x128xf32, #tpu.memory_space<vmem>>, vector<128x128xf32>,
    return
  }
  func.func @transform_0(%arg0: i32, %arg1: i32) -> (i32, i32) {
    %c0_i32 = arith.constant 0 : i32
    %c0_i32_0 = arith.constant 0 : i32
    return %arg1, %c0_i32 : i32, i32
  }
  func.func @transform_1(%arg0: i32, %arg1: i32) -> (i32, i32) {
    %c0_i32 = arith.constant 0 : i32
    %c0_i32_0 = arith.constant 0 : i32
    return %c0_i32, %arg0 : i32, i32
  }
  func.func @transform_2(%arg0: i32, %arg1: i32) -> (i32, i32) {
    %c0_i32 = arith.constant 0 : i32
    %c0_i32_0 = arith.constant 0 : i32
    return %c0_i32, %arg0 : i32, i32
  }
  func.func @transform_3(%arg0: i32, %arg1: i32) -> (i32, i32) {
    %c0_i32 = arith.constant 0 : i32
    return %arg1, %arg0 : i32, i32
  }
}

</mosaic_0001>

<llo_original>
// kernel: patch_embedding_forward.1
$region0: #{patch_embedding_forward.1}
  #allocation0 [shape = 'u32[]', space=smem, size = 0x4, offset = 0x4, fixed_abs, tag = 'smem constant byte address 0x4 - core index']
  #allocation1 [shape = 'u32[144,128]{1,0:T(1,128)}', space=vmem, size = 0x12000, scoped, tag = 'internal scratch']
  %s0 = inlined_call_operand.vmem [shape: bf16[128,256], index: 0, kind: input, shape index: {}]
  %s1 = inlined_call_operand.vmem [shape: bf16[256,128], index: 1, kind: input, shape index: {}]
  %s2 = inlined_call_operand.vmem [shape: f32[1,128], index: 2, kind: input, shape index: {}]
  %s3 = inlined_call_operand.vmem [shape: f32[128,128], index: 3, kind: output, shape index: {}]
  %s4 = sld [smem:[#allocation0]]
  $region22: #{patch_embedding_forward.1} parent=0
    _
  %s6 = ssub.s32 1, %s4
  %s7 = scalar_select 0, %s6, %s4
  // Predicated region
  $region2: #{patch_embedding_forward.1} parent=0 // pred_check
    _
  $region3: #{patch_embedding_forward.1} parent=0 // pred_check_branch
    %9 = sbr.rel (0) target = $region5
  $region4: #{patch_embedding_forward.1} parent=0 // pred_region
    _
  $region5: #{patch_embedding_forward.1} parent=0 // pred_fallthru
    _
  // Predicated region
  $region6: #{patch_embedding_forward.1} parent=0 // pred_check
    _
  $region7: #{patch_embedding_forward.1} parent=0 // pred_check_branch
    %11 = sbr.rel (0) target = $region9
  $region8: #{patch_embedding_forward.1} parent=0 // pred_region
    _
  $region9: #{patch_embedding_forward.1} parent=0 // pred_fallthru
    _
  // Predicated region
  $region10: #{patch_embedding_forward.1} parent=0 // pred_check
    _
  $region11: #{patch_embedding_forward.1} parent=0 // pred_check_branch
    %13 = sbr.rel (0) target = $region13
  $region12: #{patch_embedding_forward.1} parent=0 // pred_region
    _
  $region13: #{patch_embedding_forward.1} parent=0 // pred_fallthru
    _
  %v15 = vld [vmem:[%s0] sm:$0xff]
  %v16 = vld [vmem:[%s0 + $0x8] sm:$0xff]
  %v17 = vld [vmem:[%s0 + $0x10] sm:$0xff]
  %v18 = vld [vmem:[%s0 + $0x18] sm:$0xff]
  %v19 = vld [vmem:[%s0 + $0x20] sm:$0xff]
  %v20 = vld [vmem:[%s0 + $0x28] sm:$0xff]
  %v21 = vld [vmem:[%s0 + $0x30] sm:$0xff]
  %v22 = vld [vmem:[%s0 + $0x38] sm:$0xff]
  %v23 = vld [vmem:[%s0 + $0x40] sm:$0xff]
  %v24 = vld [vmem:[%s0 + $0x48] sm:$0xff]
  %v25 = vld [vmem:[%s0 + $0x50] sm:$0xff]
  %v26 = vld [vmem:[%s0 + $0x58] sm:$0xff]
  %v27 = vld [vmem:[%s0 + $0x60] sm:$0xff]
  %v28 = vld [vmem:[%s0 + $0x68] sm:$0xff]
  %v29 = vld [vmem:[%s0 + $0x70] sm:$0xff]
  %v30 = vld [vmem:[%s0 + $0x78] sm:$0xff]
  %v31 = vld [vmem:[%s1] sm:$0xf]
  %v32 = vld [vmem:[%s1 + $0x4] sm:$0xf]
  %v33 = vld [vmem:[%s1 + $0x8] sm:$0xf]
  %v34 = vld [vmem:[%s1 + $0xc] sm:$0xf]
  %v35 = vld [vmem:[%s1 + $0x10] sm:$0xf]
  %v36 = vld [vmem:[%s1 + $0x14] sm:$0xf]
  %v37 = vld [vmem:[%s1 + $0x18] sm:$0xf]
  %v38 = vld [vmem:[%s1 + $0x1c] sm:$0xf]
  %v39 = vld [vmem:[%s1 + $0x20] sm:$0xf]
  %v40 = vld [vmem:[%s1 + $0x24] sm:$0xf]
  %v41 = vld [vmem:[%s1 + $0x28] sm:$0xf]
  %v42 = vld [vmem:[%s1 + $0x2c] sm:$0xf]
  %v43 = vld [vmem:[%s1 + $0x30] sm:$0xf]
  %v44 = vld [vmem:[%s1 + $0x34] sm:$0xf]
  %v45 = vld [vmem:[%s1 + $0x38] sm:$0xf]
  %v46 = vld [vmem:[%s1 + $0x3c] sm:$0xf]
  %v47 = vld [vmem:[%s1 + $0x40] sm:$0xf]
  %v48 = vld [vmem:[%s1 + $0x44] sm:$0xf]
  %v49 = vld [vmem:[%s1 + $0x48] sm:$0xf]
  %v50 = vld [vmem:[%s1 + $0x4c] sm:$0xf]
  %v51 = vld [vmem:[%s1 + $0x50] sm:$0xf]
  %v52 = vld [vmem:[%s1 + $0x54] sm:$0xf]
  %v53 = vld [vmem:[%s1 + $0x58] sm:$0xf]
  %v54 = vld [vmem:[%s1 + $0x5c] sm:$0xf]
  %v55 = vld [vmem:[%s1 + $0x60] sm:$0xf]
  %v56 = vld [vmem:[%s1 + $0x64] sm:$0xf]
  %v57 = vld [vmem:[%s1 + $0x68] sm:$0xf]
  %v58 = vld [vmem:[%s1 + $0x6c] sm:$0xf]
  %v59 = vld [vmem:[%s1 + $0x70] sm:$0xf]
  %v60 = vld [vmem:[%s1 + $0x74] sm:$0xf]
  %v61 = vld [vmem:[%s1 + $0x78] sm:$0xf]
  %v62 = vld [vmem:[%s1 + $0x7c] sm:$0xf]
  %v63 = vld [vmem:[%s2] sm:$0x1]
  %v65 = vlaneseq
  %v66 = vshrl.u32 %v65, 7
  %v67 = vsub.s32 0, %v66
  %v68 = vrot.slane %v63, %v67
  %v86 = vunpack.c.l.b16 %v15
  %v87 = vunpack.c.h.b16 %v15
  %v88 = vunpack.c.l.b16 %v16
  %v89 = vunpack.c.h.b16 %v16
  %v90 = vunpack.c.l.b16 %v17
  %v91 = vunpack.c.h.b16 %v17
  %v92 = vunpack.c.l.b16 %v18
  %v93 = vunpack.c.h.b16 %v18
  %v94 = vunpack.c.l.b16 %v19
  %v95 = vunpack.c.h.b16 %v19
  %v96 = vunpack.c.l.b16 %v20
  %v97 = vunpack.c.h.b16 %v20
  %v98 = vunpack.c.l.b16 %v21
  %v99 = vunpack.c.h.b16 %v21
  %v100 = vunpack.c.l.b16 %v22
  %v101 = vunpack.c.h.b16 %v22
  %v102 = vunpack.c.l.b16 %v23
  %v103 = vunpack.c.h.b16 %v23
  %v104 = vunpack.c.l.b16 %v24
  %v105 = vunpack.c.h.b16 %v24
  %v106 = vunpack.c.l.b16 %v25
  %v107 = vunpack.c.h.b16 %v25
  %v108 = vunpack.c.l.b16 %v26
  %v109 = vunpack.c.h.b16 %v26
  %v110 = vunpack.c.l.b16 %v27
  %v111 = vunpack.c.h.b16 %v27
  %v112 = vunpack.c.l.b16 %v28
  %v113 = vunpack.c.h.b16 %v28
  %v114 = vunpack.c.l.b16 %v29
  %v115 = vunpack.c.h.b16 %v29
  %v116 = vunpack.c.l.b16 %v30
  %v117 = vunpack.c.h.b16 %v30
  %v118 = vpack.c.b16 %v88, %v86
  %v119 = vpack.c.b16 %v89, %v87
  %v120 = vpack.c.b16 %v92, %v90
  %v121 = vpack.c.b16 %v93, %v91
  %v122 = vpack.c.b16 %v96, %v94
  %v123 = vpack.c.b16 %v97, %v95
  %v124 = vpack.c.b16 %v100, %v98
  %v125 = vpack.c.b16 %v101, %v99
  %v126 = vpack.c.b16 %v104, %v102
  %v127 = vpack.c.b16 %v105, %v103
  %v128 = vpack.c.b16 %v108, %v106
  %v129 = vpack.c.b16 %v109, %v107
  %v130 = vpack.c.b16 %v112, %v110
  %v131 = vpack.c.b16 %v113, %v111
  %v132 = vpack.c.b16 %v116, %v114
  %v133 = vpack.c.b16 %v117, %v115
  %v182 = vunpack.c.l.b16 %v31
  %v183 = vunpack.c.l.b16 %v32
  %v184 = vunpack.c.l.b16 %v33
  %v185 = vunpack.c.l.b16 %v34
  %v186 = vunpack.c.l.b16 %v35
  %v187 = vunpack.c.l.b16 %v36
  %v188 = vunpack.c.l.b16 %v37
  %v189 = vunpack.c.l.b16 %v38
  %v190 = vunpack.c.l.b16 %v39
  %v191 = vunpack.c.l.b16 %v40
  %v192 = vunpack.c.l.b16 %v41
  %v193 = vunpack.c.l.b16 %v42
  %v194 = vunpack.c.l.b16 %v43
  %v195 = vunpack.c.l.b16 %v44
  %v196 = vunpack.c.l.b16 %v45
  %v197 = vunpack.c.l.b16 %v46
  %v198 = vunpack.c.l.b16 %v47
  %v199 = vunpack.c.l.b16 %v48
  %v200 = vunpack.c.l.b16 %v49
  %v201 = vunpack.c.l.b16 %v50
  %v202 = vunpack.c.l.b16 %v51
  %v203 = vunpack.c.l.b16 %v52
  %v204 = vunpack.c.l.b16 %v53
  %v205 = vunpack.c.l.b16 %v54
  %v206 = vunpack.c.l.b16 %v55
  %v207 = vunpack.c.l.b16 %v56
  %v208 = vunpack.c.l.b16 %v57
  %v209 = vunpack.c.l.b16 %v58
  %v210 = vunpack.c.l.b16 %v59
  %v211 = vunpack.c.l.b16 %v60
  %v212 = vunpack.c.l.b16 %v61
  %v213 = vunpack.c.l.b16 %v62
  %v214 = vpack.c.b16 %v183, %v182
  %v215 = vpack.c.b16 %v185, %v184
  %v216 = vpack.c.b16 %v187, %v186
  %v217 = vpack.c.b16 %v189, %v188
  %v218 = vpack.c.b16 %v191, %v190
  %v219 = vpack.c.b16 %v193, %v192
  %v220 = vpack.c.b16 %v195, %v194
  %v221 = vpack.c.b16 %v197, %v196
  %v222 = vpack.c.b16 %v199, %v198
  %v223 = vpack.c.b16 %v201, %v200
  %v224 = vpack.c.b16 %v203, %v202
  %v225 = vpack.c.b16 %v205, %v204
  %v226 = vpack.c.b16 %v207, %v206
  %v227 = vpack.c.b16 %v209, %v208
  %v228 = vpack.c.b16 %v211, %v210
  %v229 = vpack.c.b16 %v213, %v212
  %246 = vmatprep.subr.bf16.mxu0 0
  %247 = vmatpush1.bf16.msra.mxu0 %v214
  %248 = vmatprep.subr.bf16.mxu0 0
  %249 = vmatpush1.bf16.msra.mxu0 %v215
  %250 = vmatprep.subr.bf16.mxu0 0
  %251 = vmatpush1.bf16.msra.mxu0 %v216
  %252 = vmatprep.subr.bf16.mxu0 0
  %253 = vmatpush1.bf16.msra.mxu0 %v217
  %254 = vmatprep.subr.bf16.mxu0 0
  %255 = vmatpush1.bf16.msra.mxu0 %v218
  %256 = vmatprep.subr.bf16.mxu0 0
  %257 = vmatpush1.bf16.msra.mxu0 %v219
  %258 = vmatprep.subr.bf16.mxu0 0
  %259 = vmatpush1.bf16.msra.mxu0 %v220
  %260 = vmatprep.subr.bf16.mxu0 0
  %261 = vmatpush1.bf16.msra.mxu0 %v221
  %262 = vmatprep.subr.bf16.mxu0 0
  %263 = vmatpush1.bf16.msra.mxu0 %v222
  %264 = vmatprep.subr.bf16.mxu0 0
  %265 = vmatpush1.bf16.msra.mxu0 %v223
  %266 = vmatprep.subr.bf16.mxu0 0
  %267 = vmatpush1.bf16.msra.mxu0 %v224
  %268 = vmatprep.subr.bf16.mxu0 0
  %269 = vmatpush1.bf16.msra.mxu0 %v225
  %270 = vmatprep.subr.bf16.mxu0 0
  %271 = vmatpush1.bf16.msra.mxu0 %v226
  %272 = vmatprep.subr.bf16.mxu0 0
  %273 = vmatpush1.bf16.msra.mxu0 %v227
  %274 = vmatprep.subr.bf16.mxu0 0
  %275 = vmatpush1.bf16.msra.mxu0 %v228
  %276 = vmatprep.subr.bf16.mxu0 0
  %277 = vmatpush1.bf16.msra.mxu0 %v229
  %278 = vmatprep.mubr.bf16.mxu0 %v119
  %279 = vmatmul.mubr.bf16.gmra.mrb[0].mxu0 %v118
  %v280 = vpop.f32.mrb[0].mxu0
  %v281 = vadd.f32 %v68, %v280
  %v282 = vpop.f32.mrb[0].mxu0
  %v283 = vpop.f32.mrb[0].mxu0
  %v284 = vadd.f32 %v68, %v283
  %v285 = vpop.f32.mrb[0].mxu0
  %286 = vmatprep.mubr.bf16.mxu0 %v121
  %287 = vmatmul.mubr.bf16.gmra.mrb[0].mxu0 %v120
  %v288 = vpop.f32.mrb[0].mxu0
  %v289 = vadd.f32 %v68, %v288
  %v290 = vpop.f32.mrb[0].mxu0
  %v291 = vpop.f32.mrb[0].mxu0
  %v292 = vadd.f32 %v68, %v291
  %v293 = vpop.f32.mrb[0].mxu0
  %294 = vmatprep.mubr.bf16.mxu0 %v123
  %295 = vmatmul.mubr.bf16.gmra.mrb[0].mxu0 %v122
  %v296 = vpop.f32.mrb[0].mxu0
  %v297 = vadd.f32 %v68, %v296
  %v298 = vpop.f32.mrb[0].mxu0
  %v299 = vpop.f32.mrb[0].mxu0
  %v300 = vadd.f32 %v68, %v299
  %v301 = vpop.f32.mrb[0].mxu0
  %302 = vmatprep.mubr.bf16.mxu0 %v125
  %303 = vmatmul.mubr.bf16.gmra.mrb[0].mxu0 %v124
  %v304 = vpop.f32.mrb[0].mxu0
  %v305 = vadd.f32 %v68, %v304
  %v306 = vpop.f32.mrb[0].mxu0
  %v307 = vpop.f32.mrb[0].mxu0
  %v308 = vadd.f32 %v68, %v307
  %v309 = vpop.f32.mrb[0].mxu0
  %310 = vmatprep.mubr.bf16.mxu0 %v127
  %311 = vmatmul.mubr.bf16.gmra.mrb[0].mxu0 %v126
  %v312 = vpop.f32.mrb[0].mxu0
  %v313 = vadd.f32 %v68, %v312
  %v314 = vpop.f32.mrb[0].mxu0
  %v315 = vpop.f32.mrb[0].mxu0
  %v316 = vadd.f32 %v68, %v315
  %v317 = vpop.f32.mrb[0].mxu0
  %318 = vmatprep.mubr.bf16.mxu0 %v129
  %319 = vmatmul.mubr.bf16.gmra.mrb[0].mxu0 %v128
  %v320 = vpop.f32.mrb[0].mxu0
  %v321 = vadd.f32 %v68, %v320
  %v322 = vpop.f32.mrb[0].mxu0
  %v323 = vpop.f32.mrb[0].mxu0
  %v324 = vadd.f32 %v68, %v323
  %v325 = vpop.f32.mrb[0].mxu0
  %326 = vmatprep.mubr.bf16.mxu0 %v131
  %327 = vmatmul.mubr.bf16.gmra.mrb[0].mxu0 %v130
  %v328 = vpop.f32.mrb[0].mxu0
  %v329 = vadd.f32 %v68, %v328
  %v330 = vpop.f32.mrb[0].mxu0
  %v331 = vpop.f32.mrb[0].mxu0
  %v332 = vadd.f32 %v68, %v331
  %v333 = vpop.f32.mrb[0].mxu0
  %334 = vmatprep.mubr.bf16.mxu0 %v133
  %335 = vmatmul.mubr.bf16.gmra.mrb[0].mxu0 %v132
  %v336 = vpop.f32.mrb[0].mxu0
  %v337 = vadd.f32 %v68, %v336
  %v338 = vpop.f32.mrb[0].mxu0
  %v339 = vpop.f32.mrb[0].mxu0
  %v340 = vadd.f32 %v68, %v339
  %v341 = vpop.f32.mrb[0].mxu0
  %342 = vdwg.mxu0
  %343 = vst [vmem:[%s3] sm:$0xff] %v281
  %344 = vst [vmem:[%s3 + $0x8] sm:$0xff] %v284
  %345 = vst [vmem:[%s3 + $0x10] sm:$0xff] %v289
  %346 = vst [vmem:[%s3 + $0x18] sm:$0xff] %v292
  %347 = vst [vmem:[%s3 + $0x20] sm:$0xff] %v297
  %348 = vst [vmem:[%s3 + $0x28] sm:$0xff] %v300
  %349 = vst [vmem:[%s3 + $0x30] sm:$0xff] %v305
  %350 = vst [vmem:[%s3 + $0x38] sm:$0xff] %v308
  %351 = vst [vmem:[%s3 + $0x40] sm:$0xff] %v313
  %352 = vst [vmem:[%s3 + $0x48] sm:$0xff] %v316
  %353 = vst [vmem:[%s3 + $0x50] sm:$0xff] %v321
  %354 = vst [vmem:[%s3 + $0x58] sm:$0xff] %v324
  %355 = vst [vmem:[%s3 + $0x60] sm:$0xff] %v329
  %356 = vst [vmem:[%s3 + $0x68] sm:$0xff] %v332
  %357 = vst [vmem:[%s3 + $0x70] sm:$0xff] %v337
  %358 = vst [vmem:[%s3 + $0x78] sm:$0xff] %v340
  // Predicated region
  $region14: #{patch_embedding_forward.1} parent=0 // pred_check
    _
  $region15: #{patch_embedding_forward.1} parent=0 // pred_check_branch
    %360 = sbr.rel (0) target = $region17
  $region16: #{patch_embedding_forward.1} parent=0 // pred_region
    _
  $region17: #{patch_embedding_forward.1} parent=0 // pred_fallthru
    _
  // Predicated region
  $region18: #{patch_embedding_forward.1} parent=0 // pred_check
    _
  $region19: #{patch_embedding_forward.1} parent=0 // pred_check_branch
    %362 = sbr.rel (0) target = $region21
  $region20: #{patch_embedding_forward.1} parent=0 // pred_region
    _
  $region21: #{patch_embedding_forward.1} parent=0 // pred_fallthru
    _

</llo_original>
